<compile_context>
chip_gen: v5e
topology: v5e:2x2
jax: 0.10.0
libtpu: 0.0.40
codegen_flags: <defaults>
</compile_context>

<pallas_src>
import functools

import jax
import jax.numpy as jnp
import numpy as np
from jax.experimental import pallas as pl
from jax.experimental.pallas import tpu as pltpu


# ---------------------------------------------------------------------------
# Hardware-aware VMEM budgeting
# ---------------------------------------------------------------------------
def _vmem_capacity_bytes():
    try:
        info = pltpu.get_tpu_info()
        cap = getattr(info, "vmem_capacity_bytes", None)
        if cap:
            return int(cap)
    except Exception:
        pass
    return 64 * 1024 * 1024   # conservative (v7x-sized) default


def _budget_and_limit():
    """Returns (working-set budget, vmem_limit_bytes, prefer_megacore_split)."""
    cap = _vmem_capacity_bytes()
    if cap >= 100 * 1024 * 1024:                 # v5e / v6e: 128 MiB per TC
        return 56 * 1024 * 1024, 100 * 1024 * 1024, False
    # v7x (64 MiB per TC) or unknown: conservative, and prefer >=2 parallel
    # blocks so both TensorCores get work.
    return 24 * 1024 * 1024, 48 * 1024 * 1024, True


def _cost_estimate(B, L, F, x_item, out_item):
    return pl.CostEstimate(
        flops=2 * B * L * F,
        transcendentals=0,
        bytes_accessed=B * F * (L * x_item + out_item),
    )


def _maybe_split_rows(tile_b, B):
    """Halve tile_b (to a multiple of 8) if the row axis has only one block."""
    if pl.cdiv(B, tile_b) >= 2 or tile_b < 16:
        return tile_b
    half = -(-tile_b // 2)
    return -(-half // 8) * 8


def _fit_rows(B, per_row_bytes, budget):
    """Largest legal tile_b whose working set fits `budget`; None if none."""
    cands = [B] if B <= 8 else list(range((B // 8) * 8, 0, -8))
    for tb in cands:
        if tb * per_row_bytes <= budget:
            return tb
    return None


# ---------------------------------------------------------------------------
# Fused fast path (F % 128 == 0, whole L*F row-slab fits VMEM budget):
#   one DMA per tile, weighted sum done in-register from lane-aligned slices.
# ---------------------------------------------------------------------------
def _fused_kernel(w_ref, x_ref, o_ref, *, L, F):
    # w_ref : (L,) normalized weights in SMEM
    # x_ref : (tile_b, L*F) slab of the flattened input
    # o_ref : (tile_b, F) output tile
    acc = x_ref[:, 0:F].astype(jnp.float32) * w_ref[0]
    for l in range(1, L):                         # lane-aligned, unrolled FMA
        acc = acc + x_ref[:, l * F:(l + 1) * F].astype(jnp.float32) * w_ref[l]
    o_ref[...] = acc.astype(o_ref.dtype)


def _weighted_mean_fused(x2, w, B, L, F, out_dtype, tile_b, vmem_limit):
    x_item = x2.dtype.itemsize
    out_item = jnp.dtype(out_dtype).itemsize
    return pl.pallas_call(
        functools.partial(_fused_kernel, L=L, F=F),
        out_shape=jax.ShapeDtypeStruct((B, F), out_dtype),
        grid_spec=pltpu.PrefetchScalarGridSpec(
            num_scalar_prefetch=1,
            grid=(pl.cdiv(B, tile_b),),
            in_specs=[pl.BlockSpec((tile_b, L * F), lambda bi, w: (bi, 0))],
            out_specs=pl.BlockSpec((tile_b, F), lambda bi, w: (bi, 0)),
        ),
        compiler_params=pltpu.CompilerParams(
            dimension_semantics=("parallel",),
            vmem_limit_bytes=vmem_limit,
        ),
        cost_estimate=_cost_estimate(B, L, F, x_item, out_item),
    )(w, x2)


# ---------------------------------------------------------------------------
# L-grid path (F % 128 == 0 but L*F slab too big): grid = (B_tiles, F_tiles, L)
# ---------------------------------------------------------------------------
def _lgrid_f32_kernel(w_ref, x_ref, o_ref):
    # f32 output: accumulate directly into the resident output block.
    l = pl.program_id(2)
    x = x_ref[...].astype(jnp.float32)

    @pl.when(l == 0)
    def _():
        o_ref[...] = x * w_ref[l]

    @pl.when(l != 0)
    def _():
        o_ref[...] = o_ref[...] + x * w_ref[l]


def _lgrid_acc_kernel(w_ref, x_ref, o_ref, acc_ref):
    # Low-precision output: f32 scratch accumulator, cast once at the end.
    l = pl.program_id(2)

    @pl.when(l == 0)
    def _():
        acc_ref[...] = jnp.zeros_like(acc_ref)

    acc_ref[...] += x_ref[...].astype(jnp.float32) * w_ref[l]

    @pl.when(l == pl.num_programs(2) - 1)
    def _():
        o_ref[...] = acc_ref[...].astype(o_ref.dtype)


def _weighted_mean_lgrid(x2, w, B, L, F, out_dtype, budget, vmem_limit,
                         prefer_split):
    x_item = x2.dtype.itemsize
    out_item = jnp.dtype(out_dtype).itemsize
    use_acc = jnp.dtype(out_dtype) != jnp.dtype(jnp.float32)
    per_elem = 2 * x_item + 2 * out_item + (4 if use_acc else 0)

    f_cands = [f for f in range(F, 0, -128) if F % f == 0]   # multiples of 128
    b_cands = [B] if B <= 8 else list(range((B // 8) * 8, 0, -8))

    tile_b, tile_f = b_cands[-1], f_cands[-1]
    found = False
    for tf in f_cands:                       # largest lane width first
        for tb in b_cands:                   # then largest row count
            if tb * tf * per_elem <= budget:
                tile_b, tile_f = tb, tf
                found = True
                break
        if found:
            break

    # Dual-TC chips: make sure the two parallel axes expose >= 2 blocks.
    if prefer_split and pl.cdiv(B, tile_b) * (F // tile_f) < 2:
        if tile_b >= 16:
            tile_b = _maybe_split_rows(tile_b, B)
        else:
            smaller = [f for f in f_cands if f < tile_f]
            if smaller:
                tile_f = smaller[0]

    f_tiles = F // tile_f
    b_tiles = pl.cdiv(B, tile_b)
    kernel = _lgrid_acc_kernel if use_acc else _lgrid_f32_kernel
    scratch = [pltpu.VMEM((tile_b, tile_f), jnp.float32)] if use_acc else []

    return pl.pallas_call(
        kernel,
        out_shape=jax.ShapeDtypeStruct((B, F), out_dtype),
        grid_spec=pltpu.PrefetchScalarGridSpec(
            num_scalar_prefetch=1,
            grid=(b_tiles, f_tiles, L),
            in_specs=[
                # x viewed as (B, L*F): block column index = l * f_tiles + fi
                # (tile_f divides F by construction -> lane-aligned blocks).
                pl.BlockSpec((tile_b, tile_f),
                             lambda bi, fi, l, w: (bi, l * f_tiles + fi)),
            ],
            out_specs=pl.BlockSpec((tile_b, tile_f),
                                   lambda bi, fi, l, w: (bi, fi)),
            scratch_shapes=scratch,
        ),
        compiler_params=pltpu.CompilerParams(
            dimension_semantics=("parallel", "parallel", "arbitrary"),
            vmem_limit_bytes=vmem_limit,
        ),
        cost_estimate=_cost_estimate(B, L, F, x_item, out_item),
    )(w, x2)


# ---------------------------------------------------------------------------
# Fallback path (F not a multiple of 128): full (L, F) block, unrolled FMA.
# ---------------------------------------------------------------------------
def _fallback_kernel(w_ref, x_ref, o_ref, *, L):
    x = x_ref[...].astype(jnp.float32)        # (tile_b, L, F)
    acc = x[:, 0, :] * w_ref[0]
    for l in range(1, L):
        acc = acc + x[:, l, :] * w_ref[l]
    o_ref[...] = acc.astype(o_ref.dtype)


def _weighted_mean_fallback(x3, w, B, L, F, out_dtype, budget, vmem_limit,
                            prefer_split):
    x_item = x3.dtype.itemsize
    out_item = jnp.dtype(out_dtype).itemsize
    # Double-buffered in/out + f32 temporaries for the in-register accumulate.
    per_row = 2 * L * F * x_item + 2 * F * out_item + 4 * F
    if B <= 8:
        tile_b = B
    else:
        fit = max(8, int(budget // per_row) // 8 * 8)
        tile_b = min((B // 8) * 8, fit)
        if prefer_split and pl.cdiv(B, tile_b) < 2:
            tile_b = _maybe_split_rows(tile_b, B)

    return pl.pallas_call(
        functools.partial(_fallback_kernel, L=L),
        out_shape=jax.ShapeDtypeStruct((B, F), out_dtype),
        grid_spec=pltpu.PrefetchScalarGridSpec(
            num_scalar_prefetch=1,
            grid=(pl.cdiv(B, tile_b),),
            in_specs=[pl.BlockSpec((tile_b, L, F), lambda bi, w: (bi, 0, 0))],
            out_specs=pl.BlockSpec((tile_b, F), lambda bi, w: (bi, 0)),
        ),
        compiler_params=pltpu.CompilerParams(
            dimension_semantics=("parallel",),
            vmem_limit_bytes=vmem_limit,
        ),
        cost_estimate=_cost_estimate(B, L, F, x_item, out_item),
    )(w, x3)


# ---------------------------------------------------------------------------
# Public wrapper
# ---------------------------------------------------------------------------
def _normalized_weights(k, l_value=1000.0):
    w = jnp.concatenate(
        [k.astype(jnp.float32), jnp.array([l_value], dtype=jnp.float32)])
    return w / jnp.sum(w)


def weighted_mean(x, k, l_value=1000.0):
    """x: (B, L, *A) ; k: (L-1,) learnable weights ; returns (B, *A)."""
    B, L = x.shape[0], x.shape[1]
    assert L == k.shape[0] + 1, "Input length must match filter length."
    trailing = x.shape[2:]
    F = int(np.prod(trailing)) if trailing else 1

    w = _normalized_weights(k, l_value)           # hoisted, exact f32
    out_dtype = x.dtype
    budget, vmem_limit, prefer_split = _budget_and_limit()
    x_item = x.dtype.itemsize
    out_item = jnp.dtype(out_dtype).itemsize

    if F % 128 == 0:
        x2 = x.reshape(B, L * F)                  # free view: L off the sublane axis
        # Try the L-fused slab first (1 DMA per tile, no acc RMW, no L axis).
        per_row_fused = 2 * L * F * x_item + 2 * F * out_item + 4 * F
        tile_b = _fit_rows(B, per_row_fused, budget)
        if tile_b is not None:
            if prefer_split:
                tile_b = _maybe_split_rows(tile_b, B)
            out_flat = _weighted_mean_fused(x2, w, B, L, F, out_dtype,
                                            tile_b, vmem_limit)
        else:
            out_flat = _weighted_mean_lgrid(x2, w, B, L, F, out_dtype,
                                            budget, vmem_limit, prefer_split)
    else:
        out_flat = _weighted_mean_fallback(x.reshape(B, L, F), w, B, L, F,
                                           out_dtype, budget, vmem_limit,
                                           prefer_split)
    return out_flat.reshape((B,) + trailing)


def weighted_mean_ref(x, k, l_value=1000.0):
    L = x.shape[1]
    w = _normalized_weights(k, l_value)
    shape = (1, L) + (1,) * (x.ndim - 2)
    out = jnp.sum(x.astype(jnp.float32) * w.reshape(shape), axis=1)
    return out.astype(x.dtype)


if __name__ == "__main__":
    key = jax.random.PRNGKey(0)
    k_key, k1, k2, k3, k4, k5, k6 = jax.random.split(key, 7)

    B, L, H, W = 2, 5, 16, 16
    k_param = jax.random.uniform(k_key, (L - 1,), dtype=jnp.float32)

    # --- 1. f32, spatial 16x16 -> F = 256 (L-fused lane-dense path) ---------
    x = jax.random.normal(k1, (B, L, H, W), dtype=jnp.float32)
    out = jax.block_until_ready(weighted_mean(x, k_param))
    ref = weighted_mean_ref(x, k_param)
    assert out.shape == (B, H, W)
    np.testing.assert_allclose(np.asarray(out), np.asarray(ref),
                               rtol=1e-5, atol=1e-5)

    # --- 2. bf16 fused path: f32 accumulation, cast at the final store ------
    x_bf16 = jax.random.normal(k2, (B, L, H, W), dtype=jnp.bfloat16)
    out_bf16 = jax.block_until_ready(weighted_mean(x_bf16, k_param))
    ref_bf16 = weighted_mean_ref(x_bf16, k_param)
    np.testing.assert_allclose(np.asarray(out_bf16, dtype=np.float32),
                               np.asarray(ref_bf16, dtype=np.float32),
                               rtol=0, atol=5e-2)

    # --- 3. fallback path: trailing size 20 (not a multiple of 128) ---------
    x_small = jax.random.normal(k3, (B, L, 20), dtype=jnp.float32)
    out_small = jax.block_until_ready(weighted_mean(x_small, k_param))
    ref_small = weighted_mean_ref(x_small, k_param)
    assert out_small.shape == (B, 20)
    np.testing.assert_allclose(np.asarray(out_small), np.asarray(ref_small),
                               rtol=1e-5, atol=1e-5)

    # --- 4. L-grid f32 path (accumulate into o_ref), forced via tiny budget -
    w_norm = _normalized_weights(k_param)
    B4, F4 = 16, 256
    x4 = jax.random.normal(k4, (B4, L, F4), dtype=jnp.float32)
    out4 = jax.block_until_ready(
        _weighted_mean_lgrid(x4.reshape(B4, L * F4), w_norm, B4, L, F4,
                             jnp.float32, budget=16 * 1024,
                             vmem_limit=32 * 1024 * 1024, prefer_split=True))
    ref4 = weighted_mean_ref(x4, k_param)
    np.testing.assert_allclose(np.asarray(out4), np.asarray(ref4),
                               rtol=1e-5, atol=1e-5)

    # --- 5. L-grid bf16 path (f32 scratch accumulator), forced tiny budget --
    x5 = jax.random.normal(k5, (B4, L, F4), dtype=jnp.bfloat16)
    out5 = jax.block_until_ready(
        _weighted_mean_lgrid(x5.reshape(B4, L * F4), w_norm, B4, L, F4,
                             jnp.bfloat16, budget=16 * 1024,
                             vmem_limit=32 * 1024 * 1024, prefer_split=True))
    ref5 = weighted_mean_ref(x5, k_param)
    np.testing.assert_allclose(np.asarray(out5, dtype=np.float32),
                               np.asarray(ref5, dtype=np.float32),
                               rtol=0, atol=5e-2)

    # --- 6. fused path with a padded edge block (B=10 not multiple of 8) ----
    x6 = jax.random.normal(k6, (10, L, 128), dtype=jnp.float32)
    out6 = jax.block_until_ready(weighted_mean(x6, k_param))
    ref6 = weighted_mean_ref(x6, k_param)
    np.testing.assert_allclose(np.asarray(out6), np.asarray(ref6),
                               rtol=1e-5, atol=1e-5)

    print("KERNEL_OK")
</pallas_src>

<mosaic_0001>
module attributes {stable_mosaic.version = 11 : i64} {
  func.func @_fused_kernel(%arg0: i32, %arg1: memref<5xf32, #tpu.memory_space<smem>>, %arg2: memref<2x1280xf32, #tpu.memory_space<vmem>>, %arg3: memref<2x256xf32, #tpu.memory_space<vmem>>) attributes {dimension_semantics = [#tpu.dimension_semantics<parallel>], iteration_bounds = array<i64: 1>, scalar_prefetch = 1 : i64, scratch_operands = 0 : i64, tpu.core_type = #tpu.core_type<tc>, window_params = [{transform_indices = @transform_0, window_bounds = array<i64: 2, 1280>}, {transform_indices = @transform_1, window_bounds = array<i64: 2, 256>}]} {
    %c0 = arith.constant 0 : index
    %c0_0 = arith.constant 0 : index
    %0 = vector.load %arg2[%c0, %c0_0] : memref<2x1280xf32, #tpu.memory_space<vmem>>, vector<2x256xf32>
    %c0_1 = arith.constant 0 : index
    %1 = memref.load %arg1[%c0_1] : memref<5xf32, #tpu.memory_space<smem>>
    %2 = vector.broadcast %1 : f32 to vector<2x256xf32>
    %3 = arith.mulf %0, %2 : vector<2x256xf32>
    %c0_2 = arith.constant 0 : index
    %c256 = arith.constant 256 : index
    %4 = vector.load %arg2[%c0_2, %c256] : memref<2x1280xf32, #tpu.memory_space<vmem>>, vector<2x256xf32>
    %c1 = arith.constant 1 : index
    %5 = memref.load %arg1[%c1] : memref<5xf32, #tpu.memory_space<smem>>
    %6 = vector.broadcast %5 : f32 to vector<2x256xf32>
    %7 = arith.mulf %4, %6 : vector<2x256xf32>
    %8 = arith.addf %3, %7 : vector<2x256xf32>
    %c0_3 = arith.constant 0 : index
    %c512 = arith.constant 512 : index
    %9 = vector.load %arg2[%c0_3, %c512] : memref<2x1280xf32, #tpu.memory_space<vmem>>, vector<2x256xf32>
    %c2 = arith.constant 2 : index
    %10 = memref.load %arg1[%c2] : memref<5xf32, #tpu.memory_space<smem>>
    %11 = vector.broadcast %10 : f32 to vector<2x256xf32>
    %12 = arith.mulf %9, %11 : vector<2x256xf32>
    %13 = arith.addf %8, %12 : vector<2x256xf32>
    %c0_4 = arith.constant 0 : index
    %c768 = arith.constant 768 : index
    %14 = vector.load %arg2[%c0_4, %c768] : memref<2x1280xf32, #tpu.memory_space<vmem>>, vector<2x256xf32>
    %c3 = arith.constant 3 : index
    %15 = memref.load %arg1[%c3] : memref<5xf32, #tpu.memory_space<smem>>
    %16 = vector.broadcast %15 : f32 to vector<2x256xf32>
    %17 = arith.mulf %14, %16 : vector<2x256xf32>
    %18 = arith.addf %13, %17 : vector<2x256xf32>
    %c0_5 = arith.constant 0 : index
    %c1024 = arith.constant 1024 : index
    %19 = vector.load %arg2[%c0_5, %c1024] : memref<2x1280xf32, #tpu.memory_space<vmem>>, vector<2x256xf32>
    %c4 = arith.constant 4 : index
    %20 = memref.load %arg1[%c4] : memref<5xf32, #tpu.memory_space<smem>>
    %21 = vector.broadcast %20 : f32 to vector<2x256xf32>
    %22 = arith.mulf %19, %21 : vector<2x256xf32>
    %23 = arith.addf %18, %22 : vector<2x256xf32>
    %c0_6 = arith.constant 0 : index
    %c0_7 = arith.constant 0 : index
    %24 = vector.load %arg3[%c0_6, %c0_7] : memref<2x256xf32, #tpu.memory_space<vmem>>, vector<2x256xf32>
    tpu.vector_store %arg3[%c0_6, %c0_7], %23 {strides = array<i32>} : memref<2x256xf32, #tpu.memory_space<vmem>>, vector<2x256xf32>,
    return
  }
  func.func @transform_0(%arg0: i32, %arg1: memref<5xf32, #tpu.memory_space<smem>>) -> (i32, i32) {
    %c0_i32 = arith.constant 0 : i32
    %c0_i32_0 = arith.constant 0 : i32
    return %arg0, %c0_i32 : i32, i32
  }
  func.func @transform_1(%arg0: i32, %arg1: memref<5xf32, #tpu.memory_space<smem>>) -> (i32, i32) {
    %c0_i32 = arith.constant 0 : i32
    %c0_i32_0 = arith.constant 0 : i32
    return %arg0, %c0_i32 : i32, i32
  }
}

</mosaic_0001>

<llo_original>
// kernel: tpu_custom_call.1
$region0: #{tpu_custom_call.1}
  #allocation0 [shape = 'u32[]', space=smem, size = 0x4, offset = 0x4, fixed_abs, tag = 'smem constant byte address 0x4 - core index']
  #allocation1 [shape = 'u32[72,128]{1,0:T(1,128)}', space=vmem, size = 0x9000, scoped, tag = 'internal scratch']
  #allocation2 [shape = 's32[1]{0}', space=sflag, size = 0x4, scoped, tag = 'scoped memory for tpu_custom_call.1']
  #allocation3 [shape = 'u8[512]{0}', space=smem, size = 0x200, scoped, tag = 'prefetched SMEM operand 0']
  %s0 = inlined_call_operand.hbm [shape: f32[5], index: 0, kind: input, shape index: {}]
  %s1 = inlined_call_operand.hbm [shape: f32[2,1280], index: 1, kind: input, shape index: {}]
  %s2 = inlined_call_operand.hbm [shape: f32[2,256], index: 2, kind: output, shape index: {}]
  %s3 = sld [smem:[#allocation0]]
  $region18: #{tpu_custom_call.1} parent=0
    _
  %s5 = ssub.s32 1, %s3
  %s6 = scalar_select 0, %s5, %s3
  %s8 = sshll.u32 %s0, 4
  %s9 = int_to_ptr.hbm [resolvable:$true] %s8
  %11 = dma.hbm_to_smem %s9, 16, [#allocation3], [#allocation2]
  %13 = dma.done [#allocation2], 16
  %14 = sfence
  $region1: #{tpu_custom_call.1} parent=0
    #allocation4 [shape = 'u8[10240]{0}', space=vmem, size = 0x2800, scoped, tag = 'input window, operand 1, single buffered']
    #allocation5 [shape = 's32[1]{0}', space=sflag, size = 0x4, scoped, tag = 'scoped memory for tpu_custom_call.1']
    #allocation6 [shape = 's32[1]{0}', space=sflag, size = 0x4, scoped, tag = 'scoped memory for tpu_custom_call.1']
    #allocation7 [shape = 'u8[2048]{0}', space=vmem, size = 0x800, scoped, tag = 'output window, operand 0, single buffered']
    %15 = vsyncpa [#allocation5], 0
    %16 = vsyncpa [#allocation6], 0
    // Predicated region
    $region2: #{tpu_custom_call.1} parent=1 // pred_check
      _
    $region3: #{tpu_custom_call.1} parent=1 // pred_check_branch
      %18 = sbr.rel (0) target = $region5
    $region4: #{tpu_custom_call.1} parent=1 // pred_region
      %20 = vsyncadd [#allocation5], 0
      %s22 = sshll.u32 %s1, 4
      %s23 = int_to_ptr.hbm [resolvable:$true] %s22
      %s24 = sshll.u32 [#allocation4], 4
      %s25 = int_to_ptr.vmem [resolvable:$true] %s24
      %27 = dma.hbm_to_vmem [thread:$0]  %s23, 320, %s25, [#allocation5]
    $region5: #{tpu_custom_call.1} parent=1 // pred_fallthru
      _
    // Predicated region
    $region6: #{tpu_custom_call.1} parent=1 // pred_check
      _
    $region7: #{tpu_custom_call.1} parent=1 // pred_check_branch
      %29 = sbr.rel (0) target = $region9
    $region8: #{tpu_custom_call.1} parent=1 // pred_region
      %31 = dma.done [#allocation5], 320
    $region9: #{tpu_custom_call.1} parent=1 // pred_fallthru
      _
    %v32 = vld [vmem:[#allocation4] sm:$0xf]
    %s33 = sld [smem:[#allocation3]]
    %v34 = vstv %s33
    %v35 = vmul.f32 %v32, %v34
    %v36 = vld [vmem:[#allocation4 + $0x4] sm:$0xf]
    %s37 = sld [smem:[#allocation3 + $0x1]]
    %v38 = vstv %s37
    %v39 = vmul.f32 %v36, %v38
    %v40 = vadd.f32 %v35, %v39
    %v41 = vld [vmem:[#allocation4 + $0x8] sm:$0xf]
    %s42 = sld [smem:[#allocation3 + $0x2]]
    %v43 = vstv %s42
    %v44 = vmul.f32 %v41, %v43
    %v45 = vadd.f32 %v40, %v44
    %v46 = vld [vmem:[#allocation4 + $0xc] sm:$0xf]
    %s47 = sld [smem:[#allocation3 + $0x3]]
    %v48 = vstv %s47
    %v49 = vmul.f32 %v46, %v48
    %v50 = vadd.f32 %v45, %v49
    %v51 = vld [vmem:[#allocation4 + $0x10] sm:$0xf]
    %s52 = sld [smem:[#allocation3 + $0x4]]
    %v53 = vstv %s52
    %v54 = vmul.f32 %v51, %v53
    %v55 = vadd.f32 %v50, %v54
    %56 = vst [vmem:[#allocation7] sm:$0xf] %v55
    // Predicated region
    $region10: #{tpu_custom_call.1} parent=1 // pred_check
      _
    $region11: #{tpu_custom_call.1} parent=1 // pred_check_branch
      %58 = sbr.rel (0) target = $region13
    $region12: #{tpu_custom_call.1} parent=1 // pred_region
      %60 = vsyncadd [#allocation6], 0
      %s62 = sshll.u32 [#allocation7], 4
      %s63 = int_to_ptr.vmem [resolvable:$true] %s62
      %s64 = sshll.u32 %s2, 4
      %s65 = int_to_ptr.hbm [resolvable:$true] %s64
      %67 = dma.vmem_to_hbm [thread:$0]  %s63, 64, %s65, [#allocation6]
    $region13: #{tpu_custom_call.1} parent=1 // pred_fallthru
      _
    // Predicated region
    $region14: #{tpu_custom_call.1} parent=1 // pred_check
      _
    $region15: #{tpu_custom_call.1} parent=1 // pred_check_branch
      %69 = sbr.rel (0) target = $region17
    $region16: #{tpu_custom_call.1} parent=1 // pred_region
      %71 = dma.done [#allocation6], 64
    $region17: #{tpu_custom_call.1} parent=1 // pred_fallthru
      _
    %72 = vsyncpa [#allocation5], 1
    %73 = vsyncpa [#allocation6], 1

</llo_original>
